<compile_context>
chip_gen: v6e
topology: v6e:2x2x1
jax: 0.10.0
libtpu: 0.0.40
codegen_flags: <defaults>
</compile_context>

<pallas_src>
import functools

import jax
import jax.numpy as jnp
from jax import lax
from jax.experimental import pallas as pl
from jax.experimental.pallas import tpu as pltpu


def _round_up(x, m):
    return ((x + m - 1) // m) * m


def _vmem_capacity_bytes():
    try:
        info = pltpu.get_tpu_info()
        cap = getattr(info, "vmem_capacity_bytes", None)
        if cap:
            return int(cap)
    except Exception:
        pass
    return 128 * 1024 * 1024


# --------------------------------------------------------------------------
# Kernel
# --------------------------------------------------------------------------
def _pwff_kernel(x_ref, gamma_ref, beta_ref, w1_ref, b1_ref, w2_ref, b2_ref,
                 o_ref, xn_ref, *maybe_acc, eps, d_valid, mask_lanes):
    """Grid = (row tiles [parallel], ff chunks [arbitrary / reduction]).

    If no acc scratch is passed, the (resident, f32) output tile itself is the
    accumulator.
    """
    acc_ref = maybe_acc[0] if maybe_acc else o_ref
    j = pl.program_id(1)

    @pl.when(j == 0)
    def _layernorm_and_init():
        x = x_ref[...].astype(jnp.float32)
        if mask_lanes:
            # D was padded up to a multiple of 128: normalize over real lanes only.
            lane = lax.broadcasted_iota(jnp.int32, x.shape, 1)
            valid = lane < d_valid
            inv_d = 1.0 / float(d_valid)
            xm = jnp.where(valid, x, 0.0)
            mean = jnp.sum(xm, axis=-1, keepdims=True) * inv_d
            cent = jnp.where(valid, x - mean, 0.0)
            var = jnp.sum(cent * cent, axis=-1, keepdims=True) * inv_d
        else:
            mean = jnp.mean(x, axis=-1, keepdims=True)
            cent = x - mean
            var = jnp.mean(cent * cent, axis=-1, keepdims=True)
        xn = cent * lax.rsqrt(var + eps)
        xn = xn * gamma_ref[...] + beta_ref[...]          # gamma/beta in f32
        xn_ref[...] = xn.astype(xn_ref.dtype)             # cache bf16 MXU operand
        acc_ref[...] = jnp.zeros_like(acc_ref)

    # Per ff-chunk: h = relu(xn @ w1[:, chunk] + b1[chunk]); acc += h @ w2[chunk, :]
    h = jnp.dot(xn_ref[...], w1_ref[...], preferred_element_type=jnp.float32)
    h = jnp.maximum(h + b1_ref[...], 0.0)
    # TODO(synk): dropout omitted (inference mode / identity).
    acc_ref[...] += jnp.dot(h.astype(w2_ref.dtype), w2_ref[...],
                            preferred_element_type=jnp.float32
                            ).astype(acc_ref.dtype)

    @pl.when(j == pl.num_programs(1) - 1)
    def _finalize():
        # Residual: re-read the resident x tile (short live range).
        y = (acc_ref[...].astype(jnp.float32) + b2_ref[...]
             + x_ref[...].astype(jnp.float32))
        o_ref[...] = y.astype(o_ref.dtype)


# --------------------------------------------------------------------------
# One-time weight preparation (hoisted out of the per-call path)
# --------------------------------------------------------------------------
def prepare_pwff_params(gamma, beta, w1, b1, w2, b2, mxu_dtype=jnp.bfloat16):
    """Pad params to lane multiples of 128 and cast weights to the MXU dtype.

    Call once and reuse: this removes the full-size weight pad+cast HBM traffic
    from every forward call.
    """
    D, F = w1.shape
    assert gamma.shape == (D,) and beta.shape == (D,)
    assert b1.shape == (F,) and w2.shape == (F, D) and b2.shape == (D,)
    Dp = _round_up(D, 128)
    Fp = _round_up(F, 128)
    return dict(
        gamma=jnp.pad(gamma.astype(jnp.float32), (0, Dp - D)).reshape(1, Dp),
        beta=jnp.pad(beta.astype(jnp.float32), (0, Dp - D)).reshape(1, Dp),
        w1=jnp.pad(w1, ((0, Dp - D), (0, Fp - F))).astype(mxu_dtype),
        b1=jnp.pad(b1.astype(jnp.float32), (0, Fp - F)).reshape(1, Fp),
        w2=jnp.pad(w2, ((0, Fp - F), (0, Dp - D))).astype(mxu_dtype),
        b2=jnp.pad(b2.astype(jnp.float32), (0, Dp - D)).reshape(1, Dp),
    )


# --------------------------------------------------------------------------
# Tile / VMEM-budget selection
# --------------------------------------------------------------------------
def _select_tiles(M, Dp, Fp, x_itemsize, mxu_itemsize, acc_in_out, vmem_cap,
                  tm_req=None, tf_req=None):
    # Budget caps per perf review: ~56 MiB on 64 MiB parts (v7x),
    # ~110 MiB on 128 MiB parts (v5e/v6e).
    if vmem_cap <= 64 * 1024 * 1024:
        budget = 56 * 1024 * 1024
        tm_target = 512            # ~flops/byte crossover on v7x (3.2 TB/s HBM)
    else:
        budget = min(int(vmem_cap * 0.85), 110 * 1024 * 1024)
        tm_target = 1024           # v6e crossover is ~650 rows; 1024 gives margin
    if tm_req is not None:
        tm_target = tm_req
    tf_target = max(tf_req if tf_req is not None else 2048, 128)

    # Row tile: cap by M; guarantee >=2 row tiles when possible so the
    # "parallel" axis can shard across the two v7x TensorCores.
    tm = _round_up(min(tm_target, _round_up(M, 8)), 8)
    if _round_up(M, tm) // tm == 1 and tm > 16:
        tm = _round_up((tm + 1) // 2, 16)

    def est(tm_, tf_):
        return (2 * tm_ * Dp * x_itemsize                  # x tile (dbl-buffered)
                + 2 * tm_ * Dp * x_itemsize                # out tile (dbl-buffered)
                + 2 * 2 * Dp * tf_ * mxu_itemsize          # w1 + w2 chunks (dbl-buffered)
                + 2 * (3 * Dp + tf_) * 4                   # gamma/beta/b2 + b1 chunk
                + tm_ * Dp * mxu_itemsize                  # xn scratch (bf16)
                + (0 if acc_in_out else tm_ * Dp * 4)      # f32 acc scratch
                + 2 * tm_ * tf_ * 4)                       # h temporaries

    # ff tile must divide the padded ff dim; collapse to Fp when it fits so the
    # weight index_maps become constant and re-streaming across row tiles is elided.
    n = Fp // 128
    divisors = [128 * k for k in range(1, n + 1) if n % k == 0]
    if est(tm, Fp) <= budget:
        tf = Fp
    else:
        tf = max(d for d in divisors if d <= tf_target) if any(
            d <= tf_target for d in divisors) else divisors[0]
        di = divisors.index(tf)
        while est(tm, tf) > budget and di > 0:             # shrink tf first
            di -= 1
            tf = divisors[di]
        while est(tm, tf) > budget and tm > 64:            # then tm
            tm = _round_up(tm // 2, 16)

    return tm, tf, est(tm, tf), budget


# --------------------------------------------------------------------------
# Wrapper
# --------------------------------------------------------------------------
def positionwise_feed_forward(x, params, *, eps=1e-6, tm=None, tf=None):
    """x: (B, S, D); params: output of prepare_pwff_params."""
    B, S, D = x.shape
    w1_p, w2_p = params["w1"], params["w2"]
    Dp, Fp = w1_p.shape
    assert w2_p.shape == (Fp, Dp) and Dp >= D
    M = B * S
    mxu_dtype = w1_p.dtype

    # f32 outputs accumulate directly in the resident output tile.
    acc_in_out = jnp.dtype(x.dtype) == jnp.dtype(jnp.float32)

    vmem_cap = _vmem_capacity_bytes()
    tm_eff, tf_eff, est, budget = _select_tiles(
        M, Dp, Fp, jnp.dtype(x.dtype).itemsize, jnp.dtype(mxu_dtype).itemsize,
        acc_in_out, vmem_cap, tm, tf)

    Mp = _round_up(M, tm_eff)
    x2d = x.reshape(M, D)
    if Mp != M or Dp != D:
        x2d = jnp.pad(x2d, ((0, Mp - M), (0, Dp - D)))

    grid = (Mp // tm_eff, Fp // tf_eff)

    limit_cap = 56 * 2**20 if vmem_cap <= 64 * 2**20 else 110 * 2**20
    vmem_limit = int(min(max(est * 3 // 2, 32 * 2**20), limit_cap))

    kernel = functools.partial(_pwff_kernel, eps=eps, d_valid=D,
                               mask_lanes=(Dp != D))

    scratch_shapes = [pltpu.VMEM((tm_eff, Dp), mxu_dtype)]   # cached x_norm
    if not acc_in_out:
        scratch_shapes.append(pltpu.VMEM((tm_eff, Dp), jnp.float32))

    out2d = pl.pallas_call(
        kernel,
        out_shape=jax.ShapeDtypeStruct((Mp, Dp), x.dtype),
        grid_spec=pltpu.PrefetchScalarGridSpec(
            num_scalar_prefetch=0,
            grid=grid,
            in_specs=[
                pl.BlockSpec((tm_eff, Dp), lambda i, j: (i, 0)),   # x rows
                pl.BlockSpec((1, Dp), lambda i, j: (0, 0)),        # gamma
                pl.BlockSpec((1, Dp), lambda i, j: (0, 0)),        # beta
                pl.BlockSpec((Dp, tf_eff), lambda i, j: (0, j)),   # w1 chunk
                pl.BlockSpec((1, tf_eff), lambda i, j: (0, j)),    # b1 chunk
                pl.BlockSpec((tf_eff, Dp), lambda i, j: (j, 0)),   # w2 chunk
                pl.BlockSpec((1, Dp), lambda i, j: (0, 0)),        # b2
            ],
            out_specs=pl.BlockSpec((tm_eff, Dp), lambda i, j: (i, 0)),
            scratch_shapes=scratch_shapes,
        ),
        compiler_params=pltpu.CompilerParams(
            dimension_semantics=("parallel", "arbitrary"),
            vmem_limit_bytes=vmem_limit,
        ),
    )(x2d, params["gamma"], params["beta"], w1_p, params["b1"], w2_p,
      params["b2"])

    if Mp != M or Dp != D:
        out2d = out2d[:M, :D]
    return out2d.reshape(B, S, D)


# --------------------------------------------------------------------------
# Reference + self-test
# --------------------------------------------------------------------------
def _reference(x, gamma, beta, w1, b1, w2, b2, eps=1e-6, cast_dtype=None):
    """Pure-JAX reference (torch semantics); optional bf16-matched matmul inputs."""
    xf = x.astype(jnp.float32)
    mean = jnp.mean(xf, axis=-1, keepdims=True)
    var = jnp.mean((xf - mean) ** 2, axis=-1, keepdims=True)
    xn = (xf - mean) / jnp.sqrt(var + eps) * gamma + beta
    if cast_dtype is not None:
        w1 = w1.astype(cast_dtype)
        w2 = w2.astype(cast_dtype)
        xn_in = xn.astype(cast_dtype)
    else:
        xn_in = xn
    h = jnp.maximum(
        jnp.dot(xn_in, w1, preferred_element_type=jnp.float32) + b1, 0.0)
    h_in = h.astype(cast_dtype) if cast_dtype is not None else h
    y = jnp.dot(h_in, w2, preferred_element_type=jnp.float32) + b2
    return (y + xf).astype(x.dtype)


if __name__ == "__main__":
    key = jax.random.PRNGKey(0)

    def make_case(k, B, S, D, F, dtype=jnp.float32):
        kx, kw1, kb1, kw2, kb2, kg, kbt = jax.random.split(k, 7)
        x = jax.random.normal(kx, (B, S, D), dtype=jnp.float32).astype(dtype)
        gamma = 1.0 + 0.1 * jax.random.normal(kg, (D,), dtype=jnp.float32)
        beta = 0.1 * jax.random.normal(kbt, (D,), dtype=jnp.float32)
        w1 = jax.random.normal(kw1, (D, F), dtype=jnp.float32) / jnp.sqrt(D)
        b1 = 0.01 * jax.random.normal(kb1, (F,), dtype=jnp.float32)
        w2 = jax.random.normal(kw2, (F, D), dtype=jnp.float32) / jnp.sqrt(F)
        b2 = 0.01 * jax.random.normal(kb2, (D,), dtype=jnp.float32)
        return x, gamma, beta, w1, b1, w2, b2

    k1, k2, k3 = jax.random.split(key, 3)

    # Case 1: module-scale small shapes (batch=2, seq=8, input_size=32, ff_size=64).
    # Exercises the D/F padding + lane-mask LayerNorm path; f32 accumulate-in-out.
    x1, g1, bt1, w11, b11, w21, b21 = make_case(k1, 2, 8, 32, 64)
    p1 = prepare_pwff_params(g1, bt1, w11, b11, w21, b21)   # one-off pad/cast
    out1 = jax.block_until_ready(positionwise_feed_forward(x1, p1))
    ref1 = _reference(x1, g1, bt1, w11, b11, w21, b21, cast_dtype=jnp.bfloat16)
    assert out1.shape == x1.shape
    assert jnp.allclose(out1, ref1, atol=1e-2, rtol=1e-2), "case1 mismatch"

    # Case 2: multi-tile grid (2 row tiles x 2 ff chunks) -> reduction path +
    # megacore row split, no lane masking.
    x2, g2, bt2, w12, b12, w22, b22 = make_case(k2, 2, 256, 256, 512)
    p2 = prepare_pwff_params(g2, bt2, w12, b12, w22, b22)
    out2 = jax.block_until_ready(
        positionwise_feed_forward(x2, p2, tm=512, tf=256))
    ref2 = _reference(x2, g2, bt2, w12, b12, w22, b22, cast_dtype=jnp.bfloat16)
    assert out2.shape == x2.shape
    assert jnp.allclose(out2, ref2, atol=1e-2, rtol=1e-2), "case2 mismatch"

    # Case 3: bf16 input/output -> exercises the f32 acc-scratch branch.
    x3, g3, bt3, w13, b13, w23, b23 = make_case(k3, 2, 8, 32, 64,
                                                dtype=jnp.bfloat16)
    p3 = prepare_pwff_params(g3, bt3, w13, b13, w23, b23)
    out3 = jax.block_until_ready(positionwise_feed_forward(x3, p3))
    ref3 = _reference(x3, g3, bt3, w13, b13, w23, b23, cast_dtype=jnp.bfloat16)
    assert out3.shape == x3.shape
    assert jnp.allclose(out3.astype(jnp.float32), ref3.astype(jnp.float32),
                        atol=5e-2, rtol=5e-2), "case3 mismatch"

    print("KERNEL_OK")
</pallas_src>

<mosaic_0001>
module attributes {stable_mosaic.version = 11 : i64} {
  func.func @_pwff_kernel(%arg0: i32, %arg1: i32, %arg2: memref<16x128xf32, #tpu.memory_space<vmem>>, %arg3: memref<1x128xf32, #tpu.memory_space<vmem>>, %arg4: memref<1x128xf32, #tpu.memory_space<vmem>>, %arg5: memref<128x128xbf16, #tpu.memory_space<vmem>>, %arg6: memref<1x128xf32, #tpu.memory_space<vmem>>, %arg7: memref<128x128xbf16, #tpu.memory_space<vmem>>, %arg8: memref<1x128xf32, #tpu.memory_space<vmem>>, %arg9: memref<16x128xf32, #tpu.memory_space<vmem>>, %arg10: memref<16x128xbf16, #tpu.memory_space<vmem>>) attributes {dimension_semantics = [#tpu.dimension_semantics<parallel>, #tpu.dimension_semantics<arbitrary>], iteration_bounds = array<i64: 1, 1>, scalar_prefetch = 0 : i64, scratch_operands = 1 : i64, tpu.core_type = #tpu.core_type<tc>, window_params = [{transform_indices = @transform_0, window_bounds = array<i64: 16, 128>}, {pipeline_mode = #tpu.pipeline_mode<synchronous>, transform_indices = @transform_1, window_bounds = array<i64: 1, 128>}, {pipeline_mode = #tpu.pipeline_mode<synchronous>, transform_indices = @transform_2, window_bounds = array<i64: 1, 128>}, {transform_indices = @transform_3, window_bounds = array<i64: 128, 128>}, {transform_indices = @transform_4, window_bounds = array<i64: 1, 128>}, {transform_indices = @transform_5, window_bounds = array<i64: 128, 128>}, {pipeline_mode = #tpu.pipeline_mode<synchronous>, transform_indices = @transform_6, window_bounds = array<i64: 1, 128>}, {transform_indices = @transform_7, window_bounds = array<i64: 16, 128>}]} {
    %c0_i32 = arith.constant 0 : i32
    %0 = arith.cmpi eq, %arg1, %c0_i32 : i32
    %1 = arith.extui %0 : i1 to i32
    %c0_i32_0 = arith.constant 0 : i32
    %2 = arith.cmpi ne, %1, %c0_i32_0 : i32
    scf.if %2 {
      %c0_16 = arith.constant 0 : index
      %c0_17 = arith.constant 0 : index
      %20 = vector.load %arg2[%c0_16, %c0_17] : memref<16x128xf32, #tpu.memory_space<vmem>>, vector<16x128xf32>
      %21 = tpu.iota {dimensions = array<i32: 1>} : vector<16x128xi32>
      %c32_i32 = arith.constant 32 : i32
      %22 = vector.broadcast %c32_i32 : i32 to vector<16x128xi32>
      %23 = arith.cmpi slt, %21, %22 : vector<16x128xi32>
      %cst_18 = arith.constant 0.000000e+00 : f32
      %24 = vector.broadcast %cst_18 : f32 to vector<16x128xf32>
      %25 = arith.select %23, %20, %24 : vector<16x128xi1>, vector<16x128xf32>
      %cst_19 = arith.constant dense<0.000000e+00> : vector<16xf32>
      %26 = vector.multi_reduction <add>, %25, %cst_19 [1] : vector<16x128xf32> to vector<16xf32>
      %27 = vector.shape_cast %26 : vector<16xf32> to vector<16x1xf32>
      %cst_20 = arith.constant 3.125000e-02 : f32
      %28 = vector.broadcast %cst_20 : f32 to vector<16x1xf32>
      %29 = arith.mulf %27, %28 : vector<16x1xf32>
      %30 = vector.broadcast %29 : vector<16x1xf32> to vector<16x128xf32>
      %31 = arith.subf %20, %30 : vector<16x128xf32>
      %cst_21 = arith.constant 0.000000e+00 : f32
      %32 = vector.broadcast %cst_21 : f32 to vector<16x128xf32>
      %33 = arith.select %23, %31, %32 : vector<16x128xi1>, vector<16x128xf32>
      %34 = arith.mulf %33, %33 : vector<16x128xf32>
      %cst_22 = arith.constant dense<0.000000e+00> : vector<16xf32>
      %35 = vector.multi_reduction <add>, %34, %cst_22 [1] : vector<16x128xf32> to vector<16xf32>
      %36 = vector.shape_cast %35 : vector<16xf32> to vector<16x1xf32>
      %cst_23 = arith.constant 3.125000e-02 : f32
      %37 = vector.broadcast %cst_23 : f32 to vector<16x1xf32>
      %38 = arith.mulf %36, %37 : vector<16x1xf32>
      %cst_24 = arith.constant 9.99999997E-7 : f32
      %39 = vector.broadcast %cst_24 : f32 to vector<16x1xf32>
      %40 = arith.addf %38, %39 : vector<16x1xf32>
      %41 = math.rsqrt %40 : vector<16x1xf32>
      %42 = vector.broadcast %41 : vector<16x1xf32> to vector<16x128xf32>
      %43 = arith.mulf %33, %42 : vector<16x128xf32>
      %c0_25 = arith.constant 0 : index
      %c0_26 = arith.constant 0 : index
      %44 = vector.load %arg3[%c0_25, %c0_26] : memref<1x128xf32, #tpu.memory_space<vmem>>, vector<1x128xf32>
      %45 = vector.broadcast %44 : vector<1x128xf32> to vector<16x128xf32>
      %46 = arith.mulf %43, %45 : vector<16x128xf32>
      %c0_27 = arith.constant 0 : index
      %c0_28 = arith.constant 0 : index
      %47 = vector.load %arg4[%c0_27, %c0_28] : memref<1x128xf32, #tpu.memory_space<vmem>>, vector<1x128xf32>
      %48 = vector.broadcast %47 : vector<1x128xf32> to vector<16x128xf32>
      %49 = arith.addf %46, %48 : vector<16x128xf32>
      %50 = arith.truncf %49 : vector<16x128xf32> to vector<16x128xbf16>
      %c0_29 = arith.constant 0 : index
      %c0_30 = arith.constant 0 : index
      %51 = vector.load %arg10[%c0_29, %c0_30] : memref<16x128xbf16, #tpu.memory_space<vmem>>, vector<16x128xbf16>
      tpu.vector_store %arg10[%c0_29, %c0_30], %50 {strides = array<i32>} : memref<16x128xbf16, #tpu.memory_space<vmem>>, vector<16x128xbf16>,
      %cst_31 = arith.constant 0.000000e+00 : f32
      %52 = vector.broadcast %cst_31 : f32 to vector<16x128xf32>
      %c0_32 = arith.constant 0 : index
      %c0_33 = arith.constant 0 : index
      %53 = vector.load %arg9[%c0_32, %c0_33] : memref<16x128xf32, #tpu.memory_space<vmem>>, vector<16x128xf32>
      tpu.vector_store %arg9[%c0_32, %c0_33], %52 {strides = array<i32>} : memref<16x128xf32, #tpu.memory_space<vmem>>, vector<16x128xf32>,
    } else {
    }
    %c0 = arith.constant 0 : index
    %c0_1 = arith.constant 0 : index
    %3 = vector.load %arg10[%c0, %c0_1] : memref<16x128xbf16, #tpu.memory_space<vmem>>, vector<16x128xbf16>
    %c0_2 = arith.constant 0 : index
    %c0_3 = arith.constant 0 : index
    %4 = vector.load %arg5[%c0_2, %c0_3] : memref<128x128xbf16, #tpu.memory_space<vmem>>, vector<128x128xbf16>
    %cst = arith.constant dense<0.000000e+00> : vector<16x128xf32>
    %5 = tpu.matmul %3, %4, %cst {dimension_numbers = #tpu.dot_dimension_numbers<[1], [0], [0], [1], [0, 0, 1, 1], [], []>} : vector<16x128xbf16>, vector<128x128xbf16>, vector<16x128xf32> -> vector<16x128xf32>
    %c0_4 = arith.constant 0 : index
    %c0_5 = arith.constant 0 : index
    %6 = vector.load %arg6[%c0_4, %c0_5] : memref<1x128xf32, #tpu.memory_space<vmem>>, vector<1x128xf32>
    %7 = vector.broadcast %6 : vector<1x128xf32> to vector<16x128xf32>
    %8 = arith.addf %5, %7 : vector<16x128xf32>
    %cst_6 = arith.constant 0.000000e+00 : f32
    %9 = vector.broadcast %cst_6 : f32 to vector<16x128xf32>
    %10 = arith.maximumf %8, %9 : vector<16x128xf32>
    %c0_7 = arith.constant 0 : index
    %c0_8 = arith.constant 0 : index
    %11 = vector.load %arg9[%c0_7, %c0_8] : memref<16x128xf32, #tpu.memory_space<vmem>>, vector<16x128xf32>
    %12 = arith.truncf %10 : vector<16x128xf32> to vector<16x128xbf16>
    %c0_9 = arith.constant 0 : index
    %c0_10 = arith.constant 0 : index
    %13 = vector.load %arg7[%c0_9, %c0_10] : memref<128x128xbf16, #tpu.memory_space<vmem>>, vector<128x128xbf16>
    %cst_11 = arith.constant dense<0.000000e+00> : vector<16x128xf32>
    %14 = tpu.matmul %12, %13, %cst_11 {dimension_numbers = #tpu.dot_dimension_numbers<[1], [0], [0], [1], [0, 0, 1, 1], [], []>} : vector<16x128xbf16>, vector<128x128xbf16>, vector<16x128xf32> -> vector<16x128xf32>
    %15 = arith.addf %11, %14 : vector<16x128xf32>
    %c0_12 = arith.constant 0 : index
    %c0_13 = arith.constant 0 : index
    %16 = vector.load %arg9[%c0_12, %c0_13] : memref<16x128xf32, #tpu.memory_space<vmem>>, vector<16x128xf32>
    tpu.vector_store %arg9[%c0_12, %c0_13], %15 {strides = array<i32>} : memref<16x128xf32, #tpu.memory_space<vmem>>, vector<16x128xf32>,
    %c0_i32_14 = arith.constant 0 : i32
    %17 = arith.cmpi eq, %arg1, %c0_i32_14 : i32
    %18 = arith.extui %17 : i1 to i32
    %c0_i32_15 = arith.constant 0 : i32
    %19 = arith.cmpi ne, %18, %c0_i32_15 : i32
    scf.if %19 {
      %c0_16 = arith.constant 0 : index
      %c0_17 = arith.constant 0 : index
      %20 = vector.load %arg9[%c0_16, %c0_17] : memref<16x128xf32, #tpu.memory_space<vmem>>, vector<16x128xf32>
      %c0_18 = arith.constant 0 : index
      %c0_19 = arith.constant 0 : index
      %21 = vector.load %arg8[%c0_18, %c0_19] : memref<1x128xf32, #tpu.memory_space<vmem>>, vector<1x128xf32>
      %22 = vector.broadcast %21 : vector<1x128xf32> to vector<16x128xf32>
      %23 = arith.addf %20, %22 : vector<16x128xf32>
      %c0_20 = arith.constant 0 : index
      %c0_21 = arith.constant 0 : index
      %24 = vector.load %arg2[%c0_20, %c0_21] : memref<16x128xf32, #tpu.memory_space<vmem>>, vector<16x128xf32>
      %25 = arith.addf %23, %24 : vector<16x128xf32>
      %c0_22 = arith.constant 0 : index
      %c0_23 = arith.constant 0 : index
      %26 = vector.load %arg9[%c0_22, %c0_23] : memref<16x128xf32, #tpu.memory_space<vmem>>, vector<16x128xf32>
      tpu.vector_store %arg9[%c0_22, %c0_23], %25 {strides = array<i32>} : memref<16x128xf32, #tpu.memory_space<vmem>>, vector<16x128xf32>,
    } else {
    }
    return
  }
  func.func @transform_0(%arg0: i32, %arg1: i32) -> (i32, i32) {
    %c0_i32 = arith.constant 0 : i32
    %c0_i32_0 = arith.constant 0 : i32
    return %arg0, %c0_i32 : i32, i32
  }
  func.func @transform_1(%arg0: i32, %arg1: i32) -> (i32, i32) {
    %c0_i32 = arith.constant 0 : i32
    %c0_i32_0 = arith.constant 0 : i32
    %c0_i32_1 = arith.constant 0 : i32
    return %c0_i32, %c0_i32_0 : i32, i32
  }
  func.func @transform_2(%arg0: i32, %arg1: i32) -> (i32, i32) {
    %c0_i32 = arith.constant 0 : i32
    %c0_i32_0 = arith.constant 0 : i32
    %c0_i32_1 = arith.constant 0 : i32
    return %c0_i32, %c0_i32_0 : i32, i32
  }
  func.func @transform_3(%arg0: i32, %arg1: i32) -> (i32, i32) {
    %c0_i32 = arith.constant 0 : i32
    %c0_i32_0 = arith.constant 0 : i32
    return %c0_i32, %arg1 : i32, i32
  }
  func.func @transform_4(%arg0: i32, %arg1: i32) -> (i32, i32) {
    %c0_i32 = arith.constant 0 : i32
    %c0_i32_0 = arith.constant 0 : i32
    return %c0_i32, %arg1 : i32, i32
  }
  func.func @transform_5(%arg0: i32, %arg1: i32) -> (i32, i32) {
    %c0_i32 = arith.constant 0 : i32
    %c0_i32_0 = arith.constant 0 : i32
    return %arg1, %c0_i32 : i32, i32
  }
  func.func @transform_6(%arg0: i32, %arg1: i32) -> (i32, i32) {
    %c0_i32 = arith.constant 0 : i32
    %c0_i32_0 = arith.constant 0 : i32
    %c0_i32_1 = arith.constant 0 : i32
    return %c0_i32, %c0_i32_0 : i32, i32
  }
  func.func @transform_7(%arg0: i32, %arg1: i32) -> (i32, i32) {
    %c0_i32 = arith.constant 0 : i32
    %c0_i32_0 = arith.constant 0 : i32
    return %arg0, %c0_i32 : i32, i32
  }
}

</mosaic_0001>

<llo_original>
// kernel: tpu_custom_call.1
$region0: #{tpu_custom_call.1}
  #allocation0 [shape = 'u32[]', space=smem, size = 0x4, offset = 0x4, fixed_abs, tag = 'smem constant byte address 0x4 - core index']
  #allocation1 [shape = 'u32[144,128]{1,0:T(1,128)}', space=vmem, size = 0x12000, scoped, tag = 'internal scratch']
  #allocation2 [shape = 'bf16[16,128]{1,0:T(8,128)(2,1)}', space=vmem, size = 0x1000, scoped, tag = 'scratch operand']
  %s0 = inlined_call_operand.hbm [shape: f32[16,128], index: 0, kind: input, shape index: {}]
  %s1 = inlined_call_operand.vmem [shape: f32[1,128], index: 1, kind: input, shape index: {}]
  %s2 = inlined_call_operand.vmem [shape: f32[1,128], index: 2, kind: input, shape index: {}]
  %s3 = inlined_call_operand.hbm [shape: bf16[128,128], index: 3, kind: input, shape index: {}]
  %s4 = inlined_call_operand.vmem [shape: f32[1,128], index: 4, kind: input, shape index: {}]
  %s5 = inlined_call_operand.hbm [shape: bf16[128,128], index: 5, kind: input, shape index: {}]
  %s6 = inlined_call_operand.vmem [shape: f32[1,128], index: 6, kind: input, shape index: {}]
  %s7 = inlined_call_operand.hbm [shape: f32[16,128], index: 7, kind: output, shape index: {}]
  %s8 = sld [smem:[#allocation0]]
  $region58: #{tpu_custom_call.1} parent=0
    _
  %s10 = ssub.s32 1, %s8
  %s11 = scalar_select 0, %s10, %s8
  $region1: #{tpu_custom_call.1} parent=0
    #allocation3 [shape = 'u8[8192]{0}', space=vmem, size = 0x2000, scoped, tag = 'input window, operand 0, single buffered']
    #allocation4 [shape = 's32[1]{0}', space=sflag, size = 0x4, scoped, tag = 'scoped memory for tpu_custom_call.1']
    #allocation5 [shape = 's32[1]{0}', space=sflag, size = 0x4, scoped, tag = 'scoped memory for tpu_custom_call.1']
    #allocation6 [shape = 'u8[32768]{0}', space=vmem, size = 0x8000, scoped, tag = 'input window, operand 3, single buffered']
    #allocation7 [shape = 's32[1]{0}', space=sflag, size = 0x4, scoped, tag = 'scoped memory for tpu_custom_call.1']
    #allocation8 [shape = 'u8[32768]{0}', space=vmem, size = 0x8000, scoped, tag = 'input window, operand 5, single buffered']
    #allocation9 [shape = 'u8[8192]{0}', space=vmem, size = 0x2000, scoped, tag = 'output window, operand 0, single buffered']
    %12 = vsyncpa [#allocation4], 0
    %13 = vsyncpa [#allocation7], 0
    %14 = vsyncpa [#allocation5], 0
    // Predicated region
    $region2: #{tpu_custom_call.1} parent=1 // pred_check
      _
    $region3: #{tpu_custom_call.1} parent=1 // pred_check_branch
      %16 = sbr.rel (0) target = $region5
    $region4: #{tpu_custom_call.1} parent=1 // pred_region
      %s18 = ssub.s32 256, 256
      %19 = vsyncadd [#allocation4], %s18
      %s20 = sshll.u32 [#allocation3], 4
      %s21 = int_to_ptr.vmem [resolvable:$true] %s20
      %26 = dma.hbm_to_vmem [thread:$0]  %s0, 256, %s21, [#allocation4], 128, 128, 8
    $region5: #{tpu_custom_call.1} parent=1 // pred_fallthru
      _
    // Predicated region
    $region6: #{tpu_custom_call.1} parent=1 // pred_check
      _
    $region7: #{tpu_custom_call.1} parent=1 // pred_check_branch
      %28 = sbr.rel (0) target = $region9
    $region8: #{tpu_custom_call.1} parent=1 // pred_region
      _
    $region9: #{tpu_custom_call.1} parent=1 // pred_fallthru
      _
    // Predicated region
    $region10: #{tpu_custom_call.1} parent=1 // pred_check
      _
    $region11: #{tpu_custom_call.1} parent=1 // pred_check_branch
      %30 = sbr.rel (0) target = $region13
    $region12: #{tpu_custom_call.1} parent=1 // pred_region
      _
    $region13: #{tpu_custom_call.1} parent=1 // pred_fallthru
      _
    // Predicated region
    $region14: #{tpu_custom_call.1} parent=1 // pred_check
      _
    $region15: #{tpu_custom_call.1} parent=1 // pred_check_branch
      %32 = sbr.rel (0) target = $region17
    $region16: #{tpu_custom_call.1} parent=1 // pred_region
      %s34 = ssub.s32 1024, 1024
      %35 = vsyncadd [#allocation7], %s34
      %s36 = sshll.u32 [#allocation6], 4
      %s37 = int_to_ptr.vmem [resolvable:$true] %s36
      %42 = dma.hbm_to_vmem [thread:$0]  %s3, 1024, %s37, [#allocation7], 64, 64, 4
    $region17: #{tpu_custom_call.1} parent=1 // pred_fallthru
      _
    // Predicated region
    $region18: #{tpu_custom_call.1} parent=1 // pred_check
      _
    $region19: #{tpu_custom_call.1} parent=1 // pred_check_branch
      %44 = sbr.rel (0) target = $region21
    $region20: #{tpu_custom_call.1} parent=1 // pred_region
      _
    $region21: #{tpu_custom_call.1} parent=1 // pred_fallthru
      _
    // Predicated region
    $region22: #{tpu_custom_call.1} parent=1 // pred_check
      _
    $region23: #{tpu_custom_call.1} parent=1 // pred_check_branch
      %46 = sbr.rel (0) target = $region25
    $region24: #{tpu_custom_call.1} parent=1 // pred_region
      %s48 = ssub.s32 1024, 1024
      %49 = vsyncadd [#allocation7], %s48
      %s50 = sshll.u32 [#allocation8], 4
      %s51 = int_to_ptr.vmem [resolvable:$true] %s50
      %56 = dma.hbm_to_vmem [thread:$0]  %s5, 1024, %s51, [#allocation7], 64, 64, 4
    $region25: #{tpu_custom_call.1} parent=1 // pred_fallthru
      _
    // Predicated region
    $region26: #{tpu_custom_call.1} parent=1 // pred_check
      _
    $region27: #{tpu_custom_call.1} parent=1 // pred_check_branch
      %58 = sbr.rel (0) target = $region29
    $region28: #{tpu_custom_call.1} parent=1 // pred_region
      _
    $region29: #{tpu_custom_call.1} parent=1 // pred_fallthru
      _
    // Predicated region
    $region30: #{tpu_custom_call.1} parent=1 // pred_check
      _
    $region31: #{tpu_custom_call.1} parent=1 // pred_check_branch
      %60 = sbr.rel (0) target = $region33
    $region32: #{tpu_custom_call.1} parent=1 // pred_region
      %61 = dma.done [#allocation4], 256
    $region33: #{tpu_custom_call.1} parent=1 // pred_fallthru
      _
    // Predicated region
    $region34: #{tpu_custom_call.1} parent=1 // pred_check
      _
    $region35: #{tpu_custom_call.1} parent=1 // pred_check_branch
      %63 = sbr.rel (0) target = $region37
    $region36: #{tpu_custom_call.1} parent=1 // pred_region
      %64 = dma.done [#allocation7], 1024
    $region37: #{tpu_custom_call.1} parent=1 // pred_fallthru
      _
    // Predicated region
    $region38: #{tpu_custom_call.1} parent=1 // pred_check
      _
    $region39: #{tpu_custom_call.1} parent=1 // pred_check_branch
      %66 = sbr.rel (0) target = $region41
    $region40: #{tpu_custom_call.1} parent=1 // pred_region
      %67 = dma.done [#allocation7], 1024
    $region41: #{tpu_custom_call.1} parent=1 // pred_fallthru
      _
    %p69 = scmp.eq.s32.totalorder 0, 0
    // Predicated region
    $region42: #{tpu_custom_call.1} parent=1 // pred_check
      %p70 = pneg %p69
    $region43: #{tpu_custom_call.1} parent=1 // pred_check_branch
      %72 = sbr.rel (%p70) target = $region45
    $region44: #{tpu_custom_call.1} parent=1 // pred_region
      %v73 = vld [vmem:[#allocation3] sm:$0xff]
      %v74 = vld [vmem:[#allocation3 + $0x8] sm:$0xff]
      %v75 = vlaneseq
      %v76 = vand.u32 %v75, 127
      %vm77 = vcmp.lt.s32.totalorder %v76, 32
      %v78 = vsel %vm77, %v73, 0.0
      %v79 = vsel %vm77, %v74, 0.0
      %80 = vadd.xlane.f32.xlu0 %v78
      %v81 = vpop.xlane.xlu0 %80
      %82 = vadd.xlane.f32.xlu0 %v79
      %v83 = vpop.xlane.xlu0 %82
      %v84 = vmul.f32 %v81, 0.03125
      %v85 = vmul.f32 %v83, 0.03125
      %v86 = vsub.f32 %v73, %v84
      %v87 = vsub.f32 %v74, %v85
      %v88 = vsel %vm77, %v86, 0.0
      %v89 = vsel %vm77, %v87, 0.0
      %v90 = vmul.f32 %v88, %v88
      %v91 = vmul.f32 %v89, %v89
      %92 = vadd.xlane.f32.xlu0 %v90
      %v93 = vpop.xlane.xlu0 %92
      %94 = vadd.xlane.f32.xlu0 %v91
      %v95 = vpop.xlane.xlu0 %94
      %v96 = vmul.f32 %v93, 0.03125
      %v97 = vmul.f32 %v95, 0.03125
      %v98 = vadd.f32 %v96, 1e-06
      %v99 = vadd.f32 %v97, 1e-06
      %v100 = vrsqrt.pop %v98
      %v101 = vrsqrt.pop %v99
      %v102 = vmul.f32 %v88, %v100
      %v103 = vmul.f32 %v89, %v101
      %v104 = vld [vmem:[%s1] sm:$0x1]
      %v106 = vlaneseq
      %v107 = vshrl.u32 %v106, 7
      %v108 = vsub.s32 0, %v107
      %v109 = vrot.slane %v104, %v108
      %v111 = vmul.f32 %v102, %v109
      %v112 = vmul.f32 %v103, %v109
      %v113 = vld [vmem:[%s2] sm:$0x1]
      %v115 = vlaneseq
      %v116 = vshrl.u32 %v115, 7
      %v117 = vsub.s32 0, %v116
      %v118 = vrot.slane %v113, %v117
      %v120 = vadd.f32 %v111, %v118
      %v121 = vadd.f32 %v112, %v118
      %v122 = vpack.c.bf16 %v121, %v120
      %v124 = vunpack.c.l.b16 %v122
      %v125 = vunpack.c.h.b16 %v122
      %v126 = vpack.c.b16 %v124, %v124
      %v127 = vpack.c.b16 %v125, %v125
      %130 = vst [vmem:[#allocation2] sm:$0xf] %v126
      %131 = vst [vmem:[#allocation2 + $0x4] sm:$0xf] %v127
      %132 = vst [vmem:[#allocation9] sm:$0xff] 0.0
      %133 = vst [vmem:[#allocation9 + $0x8] sm:$0xff] 0.0
    $region45: #{tpu_custom_call.1} parent=1 // pred_fallthru
      _
    %v134 = vld [vmem:[#allocation2] sm:$0xf]
    %v135 = vld [vmem:[#allocation2 + $0x4] sm:$0xf]
    %v136 = vld [vmem:[#allocation6] sm:$0xf]
    %v137 = vld [vmem:[#allocation6 + $0x4] sm:$0xf]
    %v138 = vld [vmem:[#allocation6 + $0x8] sm:$0xf]
    %v139 = vld [vmem:[#allocation6 + $0xc] sm:$0xf]
    %v140 = vld [vmem:[#allocation6 + $0x10] sm:$0xf]
    %v141 = vld [vmem:[#allocation6 + $0x14] sm:$0xf]
    %v142 = vld [vmem:[#allocation6 + $0x18] sm:$0xf]
    %v143 = vld [vmem:[#allocation6 + $0x1c] sm:$0xf]
    %v144 = vld [vmem:[#allocation6 + $0x20] sm:$0xf]
    %v145 = vld [vmem:[#allocation6 + $0x24] sm:$0xf]
    %v146 = vld [vmem:[#allocation6 + $0x28] sm:$0xf]
    %v147 = vld [vmem:[#allocation6 + $0x2c] sm:$0xf]
    %v148 = vld [vmem:[#allocation6 + $0x30] sm:$0xf]
    %v149 = vld [vmem:[#allocation6 + $0x34] sm:$0xf]
    %v150 = vld [vmem:[#allocation6 + $0x38] sm:$0xf]
    %v151 = vld [vmem:[#allocation6 + $0x3c] sm:$0xf]
    %v152 = vld [vmem:[%s4] sm:$0x1]
    %v154 = vlaneseq
    %v155 = vshrl.u32 %v154, 7
    %v156 = vsub.s32 0, %v155
    %v157 = vrot.slane %v152, %v156
    %v161 = vunpack.c.l.b16 %v134
    %v162 = vunpack.c.l.b16 %v135
    %v163 = vpack.c.b16 %v162, %v161
    %v181 = vunpack.c.l.b16 %v136
    %v182 = vunpack.c.l.b16 %v137
    %v183 = vunpack.c.l.b16 %v138
    %v184 = vunpack.c.l.b16 %v139
    %v185 = vunpack.c.l.b16 %v140
    %v186 = vunpack.c.l.b16 %v141
    %v187 = vunpack.c.l.b16 %v142
    %v188 = vunpack.c.l.b16 %v143
    %v189 = vunpack.c.l.b16 %v144
    %v190 = vunpack.c.l.b16 %v145
    %v191 = vunpack.c.l.b16 %v146
    %v192 = vunpack.c.l.b16 %v147
    %v193 = vunpack.c.l.b16 %v148
    %v194 = vunpack.c.l.b16 %v149
    %v195 = vunpack.c.l.b16 %v150
    %v196 = vunpack.c.l.b16 %v151
    %v197 = vpack.c.b16 %v182, %v181
    %v198 = vpack.c.b16 %v184, %v183
    %v199 = vpack.c.b16 %v186, %v185
    %v200 = vpack.c.b16 %v188, %v187
    %v201 = vpack.c.b16 %v190, %v189
    %v202 = vpack.c.b16 %v192, %v191
    %v203 = vpack.c.b16 %v194, %v193
    %v204 = vpack.c.b16 %v196, %v195
    %213 = vmatprep.subr.bf16.mxu0 0
    %214 = vmatpush1.bf16.msra.mxu0 %v204
    %215 = vmatprep.subr.bf16.mxu0 0
    %216 = vmatpush1.bf16.msra.mxu0 %v203
    %217 = vmatprep.subr.bf16.mxu0 0
    %218 = vmatpush1.bf16.msra.mxu0 %v202
    %219 = vmatprep.subr.bf16.mxu0 0
    %220 = vmatpush1.bf16.msra.mxu0 %v201
    %221 = vmatprep.subr.bf16.mxu0 0
    %222 = vmatpush1.bf16.msra.mxu0 %v200
    %223 = vmatprep.subr.bf16.mxu0 0
    %224 = vmatpush1.bf16.msra.mxu0 %v199
    %225 = vmatprep.subr.bf16.mxu0 0
    %226 = vmatpush1.bf16.msra.mxu0 %v198
    %227 = vmatprep.subr.bf16.mxu0 0
    %228 = vmatpush1.bf16.msra.mxu0 %v197
    %229 = vmatprep.subr.bf16.mxu0 0
    %230 = vmatpush2.bf16.msra.mxu0 0
    %231 = vmatprep.subr.bf16.mxu0 0
    %232 = vmatpush2.bf16.msra.mxu0 0
    %233 = vmatprep.subr.bf16.mxu0 0
    %234 = vmatpush2.bf16.msra.mxu0 0
    %235 = vmatprep.subr.bf16.mxu0 0
    %236 = vmatpush2.bf16.msra.mxu0 0
    %237 = vmatprep.subr.bf16.mxu0 0
    %238 = vmatpush2.bf16.msra.mxu0 0
    %239 = vmatprep.subr.bf16.mxu0 0
    %240 = vmatpush2.bf16.msra.mxu0 0
    %241 = vmatprep.subr.bf16.mxu0 0
    %242 = vmatpush2.bf16.msra.mxu0 0
    %243 = vmatprep.subr.bf16.mxu0 0
    %244 = vmatpush2.bf16.msra.mxu0 0
    %245 = vmatprep.mubr.bf16.mxu0 0
    %246 = vmatmul.mubr.bf16.gmra.mxu0 %v163
    %v247 = vpop.f32.mrf.mxu0
    %v248 = vadd.f32 %v157, %v247
    %v249 = vpop.f32.mrf.mxu0
    %v250 = vpop.f32.mrf.mxu0
    %v251 = vadd.f32 %v157, %v250
    %v252 = vpop.f32.mrf.mxu0
    %253 = vdwg.mxu0
    %v254 = vmax.f32 %v248, 0.0
    %v255 = vmax.f32 %v251, 0.0
    %v256 = vld [vmem:[#allocation9] sm:$0xff]
    %v257 = vld [vmem:[#allocation9 + $0x8] sm:$0xff]
    %v258 = vpack.c.bf16 %v255, %v254
    %v259 = vld [vmem:[#allocation8] sm:$0xf]
    %v260 = vld [vmem:[#allocation8 + $0x4] sm:$0xf]
    %v261 = vld [vmem:[#allocation8 + $0x8] sm:$0xf]
    %v262 = vld [vmem:[#allocation8 + $0xc] sm:$0xf]
    %v263 = vld [vmem:[#allocation8 + $0x10] sm:$0xf]
    %v264 = vld [vmem:[#allocation8 + $0x14] sm:$0xf]
    %v265 = vld [vmem:[#allocation8 + $0x18] sm:$0xf]
    %v266 = vld [vmem:[#allocation8 + $0x1c] sm:$0xf]
    %v267 = vld [vmem:[#allocation8 + $0x20] sm:$0xf]
    %v268 = vld [vmem:[#allocation8 + $0x24] sm:$0xf]
    %v269 = vld [vmem:[#allocation8 + $0x28] sm:$0xf]
    %v270 = vld [vmem:[#allocation8 + $0x2c] sm:$0xf]
    %v271 = vld [vmem:[#allocation8 + $0x30] sm:$0xf]
    %v272 = vld [vmem:[#allocation8 + $0x34] sm:$0xf]
    %v273 = vld [vmem:[#allocation8 + $0x38] sm:$0xf]
    %v274 = vld [vmem:[#allocation8 + $0x3c] sm:$0xf]
    %v291 = vunpack.c.l.b16 %v259
    %v292 = vunpack.c.l.b16 %v260
    %v293 = vunpack.c.l.b16 %v261
    %v294 = vunpack.c.l.b16 %v262
    %v295 = vunpack.c.l.b16 %v263
    %v296 = vunpack.c.l.b16 %v264
    %v297 = vunpack.c.l.b16 %v265
    %v298 = vunpack.c.l.b16 %v266
    %v299 = vunpack.c.l.b16 %v267
    %v300 = vunpack.c.l.b16 %v268
    %v301 = vunpack.c.l.b16 %v269
    %v302 = vunpack.c.l.b16 %v270
    %v303 = vunpack.c.l.b16 %v271
    %v304 = vunpack.c.l.b16 %v272
    %v305 = vunpack.c.l.b16 %v273
    %v306 = vunpack.c.l.b16 %v274
    %v307 = vpack.c.b16 %v292, %v291
    %v308 = vpack.c.b16 %v294, %v293
    %v309 = vpack.c.b16 %v296, %v295
    %v310 = vpack.c.b16 %v298, %v297
    %v311 = vpack.c.b16 %v300, %v299
    %v312 = vpack.c.b16 %v302, %v301
    %v313 = vpack.c.b16 %v304, %v303
    %v314 = vpack.c.b16 %v306, %v305
    %323 = vmatprep.subr.bf16.mxu0 0
    %324 = vmatpush1.bf16.msra.mxu0 %v314
    %325 = vmatprep.subr.bf16.mxu0 0
    %326 = vmatpush1.bf16.msra.mxu0 %v313
    %327 = vmatprep.subr.bf16.mxu0 0
    %328 = vmatpush1.bf16.msra.mxu0 %v312
    %329 = vmatprep.subr.bf16.mxu0 0
    %330 = vmatpush1.bf16.msra.mxu0 %v311
    %331 = vmatprep.subr.bf16.mxu0 0
    %332 = vmatpush1.bf16.msra.mxu0 %v310
    %333 = vmatprep.subr.bf16.mxu0 0
    %334 = vmatpush1.bf16.msra.mxu0 %v309
    %335 = vmatprep.subr.bf16.mxu0 0
    %336 = vmatpush1.bf16.msra.mxu0 %v308
    %337 = vmatprep.subr.bf16.mxu0 0
    %338 = vmatpush1.bf16.msra.mxu0 %v307
    %339 = vmatprep.subr.bf16.mxu0 0
    %340 = vmatpush2.bf16.msra.mxu0 0
    %341 = vmatprep.subr.bf16.mxu0 0
    %342 = vmatpush2.bf16.msra.mxu0 0
    %343 = vmatprep.subr.bf16.mxu0 0
    %344 = vmatpush2.bf16.msra.mxu0 0
    %345 = vmatprep.subr.bf16.mxu0 0
    %346 = vmatpush2.bf16.msra.mxu0 0
    %347 = vmatprep.subr.bf16.mxu0 0
    %348 = vmatpush2.bf16.msra.mxu0 0
    %349 = vmatprep.subr.bf16.mxu0 0
    %350 = vmatpush2.bf16.msra.mxu0 0
    %351 = vmatprep.subr.bf16.mxu0 0
    %352 = vmatpush2.bf16.msra.mxu0 0
    %353 = vmatprep.subr.bf16.mxu0 0
    %354 = vmatpush2.bf16.msra.mxu0 0
    %355 = vmatprep.mubr.bf16.mxu0 0
    %356 = vmatmul.mubr.bf16.gmra.mxu0 %v258
    %v357 = vpop.f32.mrf.mxu0
    %v358 = vadd.f32 0.0, %v357
    %v359 = vpop.f32.mrf.mxu0
    %v360 = vpop.f32.mrf.mxu0
    %v361 = vadd.f32 0.0, %v360
    %v362 = vpop.f32.mrf.mxu0
    %363 = vdwg.mxu0
    %v364 = vadd.f32 %v256, %v358
    %v365 = vadd.f32 %v257, %v361
    %366 = vst [vmem:[#allocation9] sm:$0xff] %v364
    %367 = vst [vmem:[#allocation9 + $0x8] sm:$0xff] %v365
    // Predicated region
    $region46: #{tpu_custom_call.1} parent=1 // pred_check
      %p368 = pneg %p69
    $region47: #{tpu_custom_call.1} parent=1 // pred_check_branch
      %370 = sbr.rel (%p368) target = $region49
    $region48: #{tpu_custom_call.1} parent=1 // pred_region
      %v371 = vld [vmem:[#allocation9] sm:$0xff]
      %v372 = vld [vmem:[#allocation9 + $0x8] sm:$0xff]
      %v373 = vld [vmem:[%s6] sm:$0x1]
      %v375 = vlaneseq
      %v376 = vshrl.u32 %v375, 7
      %v377 = vsub.s32 0, %v376
      %v378 = vrot.slane %v373, %v377
      %v380 = vadd.f32 %v371, %v378
      %v381 = vadd.f32 %v372, %v378
      %v382 = vld [vmem:[#allocation3] sm:$0xff]
      %v383 = vld [vmem:[#allocation3 + $0x8] sm:$0xff]
      %v384 = vadd.f32 %v380, %v382
      %v385 = vadd.f32 %v381, %v383
      %386 = vst [vmem:[#allocation9] sm:$0xff] %v384
      %387 = vst [vmem:[#allocation9 + $0x8] sm:$0xff] %v385
    $region49: #{tpu_custom_call.1} parent=1 // pred_fallthru
      _
    // Predicated region
    $region50: #{tpu_custom_call.1} parent=1 // pred_check
      _
    $region51: #{tpu_custom_call.1} parent=1 // pred_check_branch
      %389 = sbr.rel (0) target = $region53
    $region52: #{tpu_custom_call.1} parent=1 // pred_region
      %s391 = ssub.s32 256, 256
      %392 = vsyncadd [#allocation5], %s391
      %s393 = sshll.u32 [#allocation9], 4
      %s394 = int_to_ptr.vmem [resolvable:$true] %s393
      %399 = dma.vmem_to_hbm [thread:$0]  %s394, 256, %s7, [#allocation5], 128, 128, 8
    $region53: #{tpu_custom_call.1} parent=1 // pred_fallthru
      _
    // Predicated region
    $region54: #{tpu_custom_call.1} parent=1 // pred_check
      _
    $region55: #{tpu_custom_call.1} parent=1 // pred_check_branch
      %401 = sbr.rel (0) target = $region57
    $region56: #{tpu_custom_call.1} parent=1 // pred_region
      %402 = dma.done [#allocation5], 256
    $region57: #{tpu_custom_call.1} parent=1 // pred_fallthru
      _
    %403 = vsyncpa [#allocation4], 1
    %404 = vsyncpa [#allocation7], 1
    %405 = vsyncpa [#allocation5], 1

</llo_original>
